<compile_context>
chip_gen: v7x
topology: tpu7x:2x2x1
jax: 0.10.0
libtpu: 0.0.40
codegen_flags: <defaults>
</compile_context>

<pallas_src>
import jax
import jax.numpy as jnp
from jax.experimental import pallas as pl
from jax.experimental.pallas import tpu as pltpu


def _vpsde_denoiser_kernel(x_ref, wf_ref, bc_ref, o_ref):
    x = x_ref[...]                          # (R, HW) f32, R = N*C
    wf = wf_ref[...]                        # (R, R)  folded block-diag mix: c_out*c_in*kron(I_N, W)

    # Block-diagonal channel mix unrolled as R broadcast-FMAs on the VPU.
    # R is tiny (8 here); an MXU pass would be wasted in this memory-bound regime.
    # TODO(synk): with larger tiles, switch the row operand to a stride-0
    # sublane-broadcast load from x_ref to keep the shuffle off the XLU.
    mix = jnp.zeros_like(x)
    for s in range(wf.shape[0]):            # static unroll
        mix = mix + wf[:, s:s + 1] * x[s:s + 1, :]

    # x_denoised = x + (c_out*c_in*W) @ x + c_out*(bias + c_noise*t_w)
    o_ref[...] = x + mix + bc_ref[...]


def vpsde_denoiser_forward(x, sigma, w, bias, t_w, *, beta_min, beta_d, M):
    """x: (N, C, H, W) f32, sigma: (N, 1, 1, 1) f32.  Synthetic model params w/bias/t_w."""
    N, C, H, W = x.shape
    HW = H * W
    R = N * C

    x_flat = x.reshape(R, HW).astype(jnp.float32)

    # --- per-batch scalar preconditioning coefficients (host-side scalar glue) ---
    sig_n = sigma.reshape(N).astype(jnp.float32)
    c_in_n = 1.0 / jnp.sqrt(sig_n * sig_n + 1.0)                      # 1/sqrt(sigma^2+1)
    c_out_n = -sig_n                                                  # -sigma
    br = beta_min / beta_d
    c_noise_n = M * (-br + jnp.sqrt(br * br + 2.0 * jnp.log(sig_n * sig_n + 1.0) / beta_d))

    # --- fold c_in / c_out into the channel-mix weights and bias (exact algebra) ---
    # Per batch n the scaling is a scalar, so the folded block is (c_out_n*c_in_n)*W.
    scale_n = c_out_n * c_in_n                                        # (N,)
    w_fold = jnp.kron(jnp.diag(scale_n), w.astype(jnp.float32))       # (R, R) block-diag
    bc_nc = bias[:, 0][None, :] + c_noise_n[:, None] * t_w[:, 0][None, :]   # (N, C)
    bc_fold = (c_out_n[:, None] * bc_nc).reshape(R, 1).astype(jnp.float32)  # (R, 1)

    flops = int(R * HW * (2 * R + 2))
    bytes_accessed = int(4 * (2 * R * HW + R * R + R))

    out = pl.pallas_call(
        _vpsde_denoiser_kernel,
        out_shape=jax.ShapeDtypeStruct((R, HW), jnp.float32),
        grid_spec=pl.GridSpec(
            grid=(1,),   # single block: per-grid-step overhead dwarfs compute at this size
            in_specs=[
                pl.BlockSpec((R, HW), lambda i: (0, 0)),   # x slab (full array, lane-dense)
                pl.BlockSpec((R, R), lambda i: (0, 0)),    # folded block-diag channel mix
                pl.BlockSpec((R, 1), lambda i: (0, 0)),    # folded bias term per row
            ],
            out_specs=pl.BlockSpec((R, HW), lambda i: (0, 0)),
        ),
        compiler_params=pltpu.CompilerParams(
            dimension_semantics=("arbitrary",),
            vmem_limit_bytes=32 * 1024 * 1024,
        ),
        cost_estimate=pl.CostEstimate(
            flops=flops, transcendentals=0, bytes_accessed=bytes_accessed),
    )(x_flat, w_fold, bc_fold)

    return out.reshape(N, C, H, W)


def vpsde_denoiser_ref(x, sigma, w, bias, t_w, beta_min, beta_d, M):
    """Pure-JAX reference mirroring the PyTorch forward with the same synthetic model."""
    c_skip = 1.0
    c_out = -sigma
    c_in = 1.0 / jnp.sqrt(sigma ** 2.0 + 1.0)
    br = beta_min / beta_d
    c_noise = M * (-br + jnp.sqrt(br ** 2.0 + 2.0 * jnp.log(sigma ** 2.0 + 1.0) / beta_d))
    N, C, H, W = x.shape
    h = (c_in * x).reshape(N, C, H * W)
    out = (jnp.einsum("ck,nkj->ncj", w, h)
           + bias[None]
           + c_noise.reshape(N, 1, 1) * t_w[None])
    out = out.reshape(N, C, H, W)
    return c_skip * x + c_out * out


if __name__ == "__main__":
    key = jax.random.PRNGKey(0)
    k1, k2, k3, k4, k5 = jax.random.split(key, 5)
    N, C, H, W = 2, 4, 16, 16
    beta_min, beta_d, M = 0.1, 19.9, 1000.0   # standard VP-SDE hyperparameters

    x = jax.random.normal(k1, (N, C, H, W), dtype=jnp.float32)
    sigma = jax.random.uniform(k2, (N, 1, 1, 1), dtype=jnp.float32,
                               minval=0.1, maxval=2.0)
    # deterministic synthetic inner-model parameters
    w = jax.random.normal(k3, (C, C), dtype=jnp.float32) * 0.5
    bias = jax.random.normal(k4, (C, 1), dtype=jnp.float32) * 0.1
    t_w = jax.random.normal(k5, (C, 1), dtype=jnp.float32) * 0.001

    y = vpsde_denoiser_forward(x, sigma, w, bias, t_w,
                               beta_min=beta_min, beta_d=beta_d, M=M)
    jax.block_until_ready(y)

    y_ref = vpsde_denoiser_ref(x, sigma, w, bias, t_w, beta_min, beta_d, M)
    assert y.shape == (N, C, H, W)
    assert jnp.allclose(y, y_ref, atol=1e-4, rtol=1e-4), "mismatch vs reference"
    print("KERNEL_OK")
</pallas_src>

<mosaic_0001>
module attributes {stable_mosaic.version = 11 : i64} {
  func.func @_vpsde_denoiser_kernel(%arg0: i32, %arg1: memref<8x256xf32, #tpu.memory_space<vmem>>, %arg2: memref<8x8xf32, #tpu.memory_space<vmem>>, %arg3: memref<8x1xf32, #tpu.memory_space<vmem>>, %arg4: memref<8x256xf32, #tpu.memory_space<vmem>>) attributes {dimension_semantics = [#tpu.dimension_semantics<arbitrary>], iteration_bounds = array<i64: 1>, scalar_prefetch = 0 : i64, scratch_operands = 0 : i64, tpu.core_type = #tpu.core_type<tc>, window_params = [{pipeline_mode = #tpu.pipeline_mode<synchronous>, transform_indices = @transform_0, window_bounds = array<i64: 8, 256>}, {pipeline_mode = #tpu.pipeline_mode<synchronous>, transform_indices = @transform_1, window_bounds = array<i64: 8, 8>}, {pipeline_mode = #tpu.pipeline_mode<synchronous>, transform_indices = @transform_2, window_bounds = array<i64: 8, 1>}, {pipeline_mode = #tpu.pipeline_mode<synchronous>, transform_indices = @transform_3, window_bounds = array<i64: 8, 256>}]} {
    %c0 = arith.constant 0 : index
    %c0_0 = arith.constant 0 : index
    %0 = vector.load %arg1[%c0, %c0_0] : memref<8x256xf32, #tpu.memory_space<vmem>>, vector<8x256xf32>
    %c0_1 = arith.constant 0 : index
    %c0_2 = arith.constant 0 : index
    %1 = vector.load %arg2[%c0_1, %c0_2] : memref<8x8xf32, #tpu.memory_space<vmem>>, vector<8x8xf32>
    %cst = arith.constant 0.000000e+00 : f32
    %2 = vector.broadcast %cst : f32 to vector<8x256xf32>
    %3 = vector.extract_strided_slice %1 {offsets = [0, 0], sizes = [8, 1], strides = [1, 1]} : vector<8x8xf32> to vector<8x1xf32>
    %4 = vector.extract_strided_slice %0 {offsets = [0, 0], sizes = [1, 256], strides = [1, 1]} : vector<8x256xf32> to vector<1x256xf32>
    %5 = vector.broadcast %3 : vector<8x1xf32> to vector<8x256xf32>
    %6 = vector.broadcast %4 : vector<1x256xf32> to vector<8x256xf32>
    %7 = arith.mulf %5, %6 : vector<8x256xf32>
    %8 = arith.addf %2, %7 : vector<8x256xf32>
    %9 = vector.extract_strided_slice %1 {offsets = [0, 1], sizes = [8, 1], strides = [1, 1]} : vector<8x8xf32> to vector<8x1xf32>
    %10 = vector.extract_strided_slice %0 {offsets = [1, 0], sizes = [1, 256], strides = [1, 1]} : vector<8x256xf32> to vector<1x256xf32>
    %11 = vector.broadcast %9 : vector<8x1xf32> to vector<8x256xf32>
    %12 = vector.broadcast %10 : vector<1x256xf32> to vector<8x256xf32>
    %13 = arith.mulf %11, %12 : vector<8x256xf32>
    %14 = arith.addf %8, %13 : vector<8x256xf32>
    %15 = vector.extract_strided_slice %1 {offsets = [0, 2], sizes = [8, 1], strides = [1, 1]} : vector<8x8xf32> to vector<8x1xf32>
    %16 = vector.extract_strided_slice %0 {offsets = [2, 0], sizes = [1, 256], strides = [1, 1]} : vector<8x256xf32> to vector<1x256xf32>
    %17 = vector.broadcast %15 : vector<8x1xf32> to vector<8x256xf32>
    %18 = vector.broadcast %16 : vector<1x256xf32> to vector<8x256xf32>
    %19 = arith.mulf %17, %18 : vector<8x256xf32>
    %20 = arith.addf %14, %19 : vector<8x256xf32>
    %21 = vector.extract_strided_slice %1 {offsets = [0, 3], sizes = [8, 1], strides = [1, 1]} : vector<8x8xf32> to vector<8x1xf32>
    %22 = vector.extract_strided_slice %0 {offsets = [3, 0], sizes = [1, 256], strides = [1, 1]} : vector<8x256xf32> to vector<1x256xf32>
    %23 = vector.broadcast %21 : vector<8x1xf32> to vector<8x256xf32>
    %24 = vector.broadcast %22 : vector<1x256xf32> to vector<8x256xf32>
    %25 = arith.mulf %23, %24 : vector<8x256xf32>
    %26 = arith.addf %20, %25 : vector<8x256xf32>
    %27 = vector.extract_strided_slice %1 {offsets = [0, 4], sizes = [8, 1], strides = [1, 1]} : vector<8x8xf32> to vector<8x1xf32>
    %28 = vector.extract_strided_slice %0 {offsets = [4, 0], sizes = [1, 256], strides = [1, 1]} : vector<8x256xf32> to vector<1x256xf32>
    %29 = vector.broadcast %27 : vector<8x1xf32> to vector<8x256xf32>
    %30 = vector.broadcast %28 : vector<1x256xf32> to vector<8x256xf32>
    %31 = arith.mulf %29, %30 : vector<8x256xf32>
    %32 = arith.addf %26, %31 : vector<8x256xf32>
    %33 = vector.extract_strided_slice %1 {offsets = [0, 5], sizes = [8, 1], strides = [1, 1]} : vector<8x8xf32> to vector<8x1xf32>
    %34 = vector.extract_strided_slice %0 {offsets = [5, 0], sizes = [1, 256], strides = [1, 1]} : vector<8x256xf32> to vector<1x256xf32>
    %35 = vector.broadcast %33 : vector<8x1xf32> to vector<8x256xf32>
    %36 = vector.broadcast %34 : vector<1x256xf32> to vector<8x256xf32>
    %37 = arith.mulf %35, %36 : vector<8x256xf32>
    %38 = arith.addf %32, %37 : vector<8x256xf32>
    %39 = vector.extract_strided_slice %1 {offsets = [0, 6], sizes = [8, 1], strides = [1, 1]} : vector<8x8xf32> to vector<8x1xf32>
    %40 = vector.extract_strided_slice %0 {offsets = [6, 0], sizes = [1, 256], strides = [1, 1]} : vector<8x256xf32> to vector<1x256xf32>
    %41 = vector.broadcast %39 : vector<8x1xf32> to vector<8x256xf32>
    %42 = vector.broadcast %40 : vector<1x256xf32> to vector<8x256xf32>
    %43 = arith.mulf %41, %42 : vector<8x256xf32>
    %44 = arith.addf %38, %43 : vector<8x256xf32>
    %45 = vector.extract_strided_slice %1 {offsets = [0, 7], sizes = [8, 1], strides = [1, 1]} : vector<8x8xf32> to vector<8x1xf32>
    %46 = vector.extract_strided_slice %0 {offsets = [7, 0], sizes = [1, 256], strides = [1, 1]} : vector<8x256xf32> to vector<1x256xf32>
    %47 = vector.broadcast %45 : vector<8x1xf32> to vector<8x256xf32>
    %48 = vector.broadcast %46 : vector<1x256xf32> to vector<8x256xf32>
    %49 = arith.mulf %47, %48 : vector<8x256xf32>
    %50 = arith.addf %44, %49 : vector<8x256xf32>
    %51 = arith.addf %0, %50 : vector<8x256xf32>
    %c0_3 = arith.constant 0 : index
    %c0_4 = arith.constant 0 : index
    %52 = vector.load %arg3[%c0_3, %c0_4] : memref<8x1xf32, #tpu.memory_space<vmem>>, vector<8x1xf32>
    %53 = vector.broadcast %52 : vector<8x1xf32> to vector<8x256xf32>
    %54 = arith.addf %51, %53 : vector<8x256xf32>
    %c0_5 = arith.constant 0 : index
    %c0_6 = arith.constant 0 : index
    %55 = vector.load %arg4[%c0_5, %c0_6] : memref<8x256xf32, #tpu.memory_space<vmem>>, vector<8x256xf32>
    tpu.vector_store %arg4[%c0_5, %c0_6], %54 {strides = array<i32>} : memref<8x256xf32, #tpu.memory_space<vmem>>, vector<8x256xf32>,
    return
  }
  func.func @transform_0(%arg0: i32) -> (i32, i32) {
    %c0_i32 = arith.constant 0 : i32
    %c0_i32_0 = arith.constant 0 : i32
    %c0_i32_1 = arith.constant 0 : i32
    return %c0_i32, %c0_i32_0 : i32, i32
  }
  func.func @transform_1(%arg0: i32) -> (i32, i32) {
    %c0_i32 = arith.constant 0 : i32
    %c0_i32_0 = arith.constant 0 : i32
    %c0_i32_1 = arith.constant 0 : i32
    return %c0_i32, %c0_i32_0 : i32, i32
  }
  func.func @transform_2(%arg0: i32) -> (i32, i32) {
    %c0_i32 = arith.constant 0 : i32
    %c0_i32_0 = arith.constant 0 : i32
    %c0_i32_1 = arith.constant 0 : i32
    return %c0_i32, %c0_i32_0 : i32, i32
  }
  func.func @transform_3(%arg0: i32) -> (i32, i32) {
    %c0_i32 = arith.constant 0 : i32
    %c0_i32_0 = arith.constant 0 : i32
    %c0_i32_1 = arith.constant 0 : i32
    return %c0_i32, %c0_i32_0 : i32, i32
  }
}

</mosaic_0001>

<llo_original>
// kernel: tpu_custom_call.1
$region0: #{tpu_custom_call.1}
  #allocation0 [shape = 'u32[]', space=smem, size = 0x4, offset = 0x4, fixed_abs, tag = 'smem constant byte address 0x4 - core index']
  #allocation1 [shape = 'u32[144,128]{1,0:T(1,128)}', space=vmem, size = 0x12000, scoped, tag = 'internal scratch']
  %s0 = inlined_call_operand.hbm [shape: f32[8,256], index: 0, kind: input, shape index: {}]
  %s1 = inlined_call_operand.vmem [shape: f32[8,8], index: 1, kind: input, shape index: {}]
  %s2 = inlined_call_operand.vmem [shape: f32[8,1], index: 2, kind: input, shape index: {}]
  %s3 = inlined_call_operand.hbm [shape: f32[8,256], index: 3, kind: output, shape index: {}]
  %s4 = sld [smem:[#allocation0]]
  $region26: #{tpu_custom_call.1} parent=0
    _
  %s6 = ssub.s32 1, %s4
  %s7 = scalar_select 0, %s6, %s4
  $region1: #{tpu_custom_call.1} parent=0
    #allocation2 [shape = 'u8[8192]{0}', space=vmem, size = 0x2000, scoped, tag = 'input window, operand 0, single buffered']
    #allocation3 [shape = 's32[1]{0}', space=sflag, size = 0x4, scoped, tag = 'scoped memory for tpu_custom_call.1']
    #allocation4 [shape = 's32[1]{0}', space=sflag, size = 0x4, scoped, tag = 'scoped memory for tpu_custom_call.1']
    #allocation5 [shape = 'u8[8192]{0}', space=vmem, size = 0x2000, scoped, tag = 'output window, operand 0, single buffered']
    %8 = vsyncpa [#allocation3], 0
    %9 = vsyncpa [#allocation4], 0
    // Predicated region
    $region2: #{tpu_custom_call.1} parent=1 // pred_check
      _
    $region3: #{tpu_custom_call.1} parent=1 // pred_check_branch
      %11 = sbr.rel (0) target = $region5
    $region4: #{tpu_custom_call.1} parent=1 // pred_region
      %s13 = ssub.s32 256, 256
      %14 = vsyncadd [#allocation3], %s13
      %s16 = sshll.u32 [#allocation2], 4
      %s17 = int_to_ptr.vmem [resolvable:$true] %s16
      %19 = dma.hbm_to_vmem [thread:$0]  %s0, 256, %s17, [#allocation3]
    $region5: #{tpu_custom_call.1} parent=1 // pred_fallthru
      _
    // Predicated region
    $region6: #{tpu_custom_call.1} parent=1 // pred_check
      _
    $region7: #{tpu_custom_call.1} parent=1 // pred_check_branch
      %21 = sbr.rel (0) target = $region9
    $region8: #{tpu_custom_call.1} parent=1 // pred_region
      _
    $region9: #{tpu_custom_call.1} parent=1 // pred_fallthru
      _
    // Predicated region
    $region10: #{tpu_custom_call.1} parent=1 // pred_check
      _
    $region11: #{tpu_custom_call.1} parent=1 // pred_check_branch
      %23 = sbr.rel (0) target = $region13
    $region12: #{tpu_custom_call.1} parent=1 // pred_region
      _
    $region13: #{tpu_custom_call.1} parent=1 // pred_fallthru
      _
    // Predicated region
    $region14: #{tpu_custom_call.1} parent=1 // pred_check
      _
    $region15: #{tpu_custom_call.1} parent=1 // pred_check_branch
      %25 = sbr.rel (0) target = $region17
    $region16: #{tpu_custom_call.1} parent=1 // pred_region
      %26 = dma.done [#allocation3], 256
    $region17: #{tpu_custom_call.1} parent=1 // pred_fallthru
      _
    %v27 = vld [vmem:[#allocation2] sm:$0xff]
    %v28 = vld [vmem:[#allocation2 + $0x8] sm:$0xff]
    %v29 = vld [vmem:[%s1] sm:$0xff]
    %31 = vset.pattern.permute.xlu0 0
    %32 = vperm.xlu0 %31, %v29
    %v33 = vpop.permute.xlu0 %32
    %v35 = vlaneseq
    %v36 = vshrl.u32 %v35, 7
    %v37 = vsub.s32 0, %v36
    %v38 = vrot.slane %v27, %v37
    %v39 = vlaneseq
    %v40 = vshrl.u32 %v39, 7
    %v41 = vsub.s32 0, %v40
    %v42 = vrot.slane %v28, %v41
    %v43 = vmul.f32 %v33, %v38
    %v44 = vmul.f32 %v33, %v42
    %v45 = vadd.f32 %v43, 0.0
    %v46 = vadd.f32 %v44, 0.0
    %47 = vset.pattern.permute.xlu0 1
    %48 = vperm.xlu0 %47, %v29
    %v49 = vpop.permute.xlu0 %48
    %v51 = vlaneseq
    %v52 = vshrl.u32 %v51, 7
    %v53 = vsub.s32 1, %v52
    %v54 = vrot.slane %v27, %v53
    %v55 = vlaneseq
    %v56 = vshrl.u32 %v55, 7
    %v57 = vsub.s32 1, %v56
    %v58 = vrot.slane %v28, %v57
    %v59 = vmul.f32 %v49, %v54
    %v60 = vmul.f32 %v49, %v58
    %v61 = vadd.f32 %v45, %v59
    %v62 = vadd.f32 %v46, %v60
    %63 = vset.pattern.permute.xlu0 2
    %64 = vperm.xlu0 %63, %v29
    %v65 = vpop.permute.xlu0 %64
    %v67 = vlaneseq
    %v68 = vshrl.u32 %v67, 7
    %v69 = vsub.s32 2, %v68
    %v70 = vrot.slane %v27, %v69
    %v71 = vlaneseq
    %v72 = vshrl.u32 %v71, 7
    %v73 = vsub.s32 2, %v72
    %v74 = vrot.slane %v28, %v73
    %v75 = vmul.f32 %v65, %v70
    %v76 = vmul.f32 %v65, %v74
    %v77 = vadd.f32 %v61, %v75
    %v78 = vadd.f32 %v62, %v76
    %79 = vset.pattern.permute.xlu0 3
    %80 = vperm.xlu0 %79, %v29
    %v81 = vpop.permute.xlu0 %80
    %v83 = vlaneseq
    %v84 = vshrl.u32 %v83, 7
    %v85 = vsub.s32 3, %v84
    %v86 = vrot.slane %v27, %v85
    %v87 = vlaneseq
    %v88 = vshrl.u32 %v87, 7
    %v89 = vsub.s32 3, %v88
    %v90 = vrot.slane %v28, %v89
    %v91 = vmul.f32 %v81, %v86
    %v92 = vmul.f32 %v81, %v90
    %v93 = vadd.f32 %v77, %v91
    %v94 = vadd.f32 %v78, %v92
    %95 = vset.pattern.permute.xlu0 4
    %96 = vperm.xlu0 %95, %v29
    %v97 = vpop.permute.xlu0 %96
    %v99 = vlaneseq
    %v100 = vshrl.u32 %v99, 7
    %v101 = vsub.s32 4, %v100
    %v102 = vrot.slane %v27, %v101
    %v103 = vlaneseq
    %v104 = vshrl.u32 %v103, 7
    %v105 = vsub.s32 4, %v104
    %v106 = vrot.slane %v28, %v105
    %v107 = vmul.f32 %v97, %v102
    %v108 = vmul.f32 %v97, %v106
    %v109 = vadd.f32 %v93, %v107
    %v110 = vadd.f32 %v94, %v108
    %111 = vset.pattern.permute.xlu0 5
    %112 = vperm.xlu0 %111, %v29
    %v113 = vpop.permute.xlu0 %112
    %v115 = vlaneseq
    %v116 = vshrl.u32 %v115, 7
    %v117 = vsub.s32 5, %v116
    %v118 = vrot.slane %v27, %v117
    %v119 = vlaneseq
    %v120 = vshrl.u32 %v119, 7
    %v121 = vsub.s32 5, %v120
    %v122 = vrot.slane %v28, %v121
    %v123 = vmul.f32 %v113, %v118
    %v124 = vmul.f32 %v113, %v122
    %v125 = vadd.f32 %v109, %v123
    %v126 = vadd.f32 %v110, %v124
    %127 = vset.pattern.permute.xlu0 6
    %128 = vperm.xlu0 %127, %v29
    %v129 = vpop.permute.xlu0 %128
    %v131 = vlaneseq
    %v132 = vshrl.u32 %v131, 7
    %v133 = vsub.s32 6, %v132
    %v134 = vrot.slane %v27, %v133
    %v135 = vlaneseq
    %v136 = vshrl.u32 %v135, 7
    %v137 = vsub.s32 6, %v136
    %v138 = vrot.slane %v28, %v137
    %v139 = vmul.f32 %v129, %v134
    %v140 = vmul.f32 %v129, %v138
    %v141 = vadd.f32 %v125, %v139
    %v142 = vadd.f32 %v126, %v140
    %143 = vset.pattern.permute.xlu0 7
    %144 = vperm.xlu0 %143, %v29
    %v145 = vpop.permute.xlu0 %144
    %v147 = vlaneseq
    %v148 = vshrl.u32 %v147, 7
    %v149 = vsub.s32 7, %v148
    %v150 = vrot.slane %v27, %v149
    %v151 = vlaneseq
    %v152 = vshrl.u32 %v151, 7
    %v153 = vsub.s32 7, %v152
    %v154 = vrot.slane %v28, %v153
    %v155 = vmul.f32 %v145, %v150
    %v156 = vmul.f32 %v145, %v154
    %v157 = vadd.f32 %v141, %v155
    %v158 = vadd.f32 %v142, %v156
    %v159 = vadd.f32 %v27, %v157
    %v160 = vadd.f32 %v28, %v158
    %v161 = vld [vmem:[%s2] sm:$0xff]
    %163 = vset.pattern.permute.xlu0 0
    %164 = vperm.xlu0 %163, %v161
    %v165 = vpop.permute.xlu0 %164
    %v167 = vadd.f32 %v159, %v165
    %v168 = vadd.f32 %v160, %v165
    %169 = vst [vmem:[#allocation5] sm:$0xff] %v167
    %170 = vst [vmem:[#allocation5 + $0x8] sm:$0xff] %v168
    // Predicated region
    $region18: #{tpu_custom_call.1} parent=1 // pred_check
      _
    $region19: #{tpu_custom_call.1} parent=1 // pred_check_branch
      %172 = sbr.rel (0) target = $region21
    $region20: #{tpu_custom_call.1} parent=1 // pred_region
      %s174 = ssub.s32 256, 256
      %175 = vsyncadd [#allocation4], %s174
      %s177 = sshll.u32 [#allocation5], 4
      %s178 = int_to_ptr.vmem [resolvable:$true] %s177
      %180 = dma.vmem_to_hbm [thread:$0]  %s178, 256, %s3, [#allocation4]
    $region21: #{tpu_custom_call.1} parent=1 // pred_fallthru
      _
    // Predicated region
    $region22: #{tpu_custom_call.1} parent=1 // pred_check
      _
    $region23: #{tpu_custom_call.1} parent=1 // pred_check_branch
      %182 = sbr.rel (0) target = $region25
    $region24: #{tpu_custom_call.1} parent=1 // pred_region
      %183 = dma.done [#allocation4], 256
    $region25: #{tpu_custom_call.1} parent=1 // pred_fallthru
      _
    %184 = vsyncpa [#allocation3], 1
    %185 = vsyncpa [#allocation4], 1

</llo_original>
